<compile_context>
chip_gen: v7x
topology: tpu7x:2x2x1
jax: 0.10.0
libtpu: 0.0.40
codegen_flags: <defaults>
</compile_context>

<pallas_src>
import functools

import jax
import jax.numpy as jnp
from jax import lax
from jax.experimental import pallas as pl
from jax.experimental.pallas import tpu as pltpu

_LANES = 128
_ROW_ALIGN = 16            # multiple of the bf16 sublane tile; safe for every dtype
_MAX_TILE_ROWS = 4096      # (4096, 128) f32 tile = 2 MiB per pipeline buffer
_SMALL_N = 16384           # below this, a fused XLA expression beats kernel launch cost


def _bce_with_logits(x, y):
    # Numerically stable PyTorch form: max(x,0) - x*y + log1p(exp(-|x|))
    return jnp.maximum(x, 0.0) - x * y + jnp.log1p(jnp.exp(-jnp.abs(x)))


def _fold_rows(v):
    # (tile_rows, 128) f32 -> (8, 128): leading-axis sum = vreg-wise VPU adds
    # (the (8,128) tiles stay intact, so the reshape is layout-trivial).
    return v.reshape(-1, 8, _LANES).sum(axis=0)


def _tile_base(steps_per_chunk, tile_rows):
    chunk = pl.program_id(0)
    step = pl.program_id(1)
    return (chunk * steps_per_chunk + step) * (tile_rows * _LANES)


def _global_index(base, tile_rows):
    row = lax.broadcasted_iota(jnp.int32, (tile_rows, _LANES), 0)
    lane = lax.broadcasted_iota(jnp.int32, (tile_rows, _LANES), 1)
    return base + row * _LANES + lane


def _daloss_default_kernel(meta_ref, x_ref, out_ref, *, tile_rows, steps_per_chunk):
    """Default dc_target path: target derived from the global index (no y stream)."""
    step = pl.program_id(1)
    tile_elems = tile_rows * _LANES
    base = _tile_base(steps_per_chunk, tile_rows)
    num = meta_ref[0]
    bsz = meta_ref[1]

    @pl.when(step == 0)
    def _init():
        out_ref[...] = jnp.zeros_like(out_ref)

    x = x_ref[...].astype(jnp.float32)

    fully_src = base + tile_elems <= bsz                                   # target == 1
    fully_tgt = jnp.logical_and(base >= bsz, base + tile_elems <= num)     # target == 0

    @pl.when(fully_src)
    def _src():
        out_ref[...] += _fold_rows(_bce_with_logits(x, 1.0))

    @pl.when(fully_tgt)
    def _tgt():
        out_ref[...] += _fold_rows(_bce_with_logits(x, 0.0))

    # At most one tile per call hits this branch (batch_size boundary / padded tail).
    @pl.when(jnp.logical_not(jnp.logical_or(fully_src, fully_tgt)))
    def _edge():
        gidx = _global_index(base, tile_rows)
        y = (gidx < bsz).astype(jnp.float32)
        loss = jnp.where(gidx < num, _bce_with_logits(x, y), 0.0)
        out_ref[...] += _fold_rows(loss)


def _daloss_target_kernel(meta_ref, x_ref, y_ref, out_ref, *, tile_rows,
                          steps_per_chunk):
    """Explicit dc_target path: targets streamed alongside the logits."""
    step = pl.program_id(1)
    tile_elems = tile_rows * _LANES
    base = _tile_base(steps_per_chunk, tile_rows)
    num = meta_ref[0]

    @pl.when(step == 0)
    def _init():
        out_ref[...] = jnp.zeros_like(out_ref)

    x = x_ref[...].astype(jnp.float32)
    y = y_ref[...].astype(jnp.float32)
    fully_valid = base + tile_elems <= num

    @pl.when(fully_valid)
    def _interior():
        out_ref[...] += _fold_rows(_bce_with_logits(x, y))

    @pl.when(jnp.logical_not(fully_valid))
    def _tail():
        gidx = _global_index(base, tile_rows)
        out_ref[...] += _fold_rows(
            jnp.where(gidx < num, _bce_with_logits(x, y), 0.0))


def _round_up(v, m):
    return -(-v // m) * m


def _plan(num, max_tile_rows):
    """Pick (tile_rows, rows_padded, num_chunks, steps_per_chunk) with minimal padding."""
    rows = _round_up(max(1, -(-num // _LANES)), _ROW_ALIGN)
    max_tile_rows = max(_ROW_ALIGN, (int(max_tile_rows) // _ROW_ALIGN) * _ROW_ALIGN)
    n_tiles = -(-rows // max_tile_rows)
    num_chunks = 2 if n_tiles >= 2 else 1    # feeds both TCs on v7x; harmless on 1-TC chips
    n_tiles = _round_up(n_tiles, num_chunks)
    tile_rows = _round_up(-(-rows // n_tiles), _ROW_ALIGN)   # balanced: overshoot <= a few row-groups
    rows_padded = n_tiles * tile_rows
    return tile_rows, rows_padded, num_chunks, n_tiles // num_chunks


def _to_tiles(flat, rows_padded):
    total = rows_padded * _LANES
    if flat.shape[0] != total:               # minimal tail pad; skipped when already aligned
        flat = jnp.pad(flat, (0, total - flat.shape[0]))
    return flat.reshape(rows_padded, _LANES)


def da_loss(ad_out, coeff=1.0, dc_target=None, *,
            max_tile_rows=_MAX_TILE_ROWS, small_n_threshold=_SMALL_N):
    """Pallas TPU implementation of DALoss.forward.

    ad_out : (2*B, 1) or (2*B,) domain-discriminator logits (any float dtype).
    Returns a float32 scalar: coeff * mean(BCEWithLogits(ad_out.view(-1), dc_target)).
    """
    batch_size = ad_out.shape[0] // 2
    x = jnp.reshape(ad_out, (-1,))           # keep original dtype; upcast in-kernel
    num = x.shape[0]
    if num == 0:
        raise ValueError("ad_out must be non-empty")
    if dc_target is None and num != 2 * batch_size:
        raise ValueError(
            "DALoss default dc_target requires an even number of flattened logits "
            f"(got {num}); pass dc_target explicitly otherwise.")
    if dc_target is not None:
        y = jnp.reshape(dc_target, (-1,)).astype(ad_out.dtype)   # matches dc_target.to(ad_out)
        if y.shape[0] != num:
            raise ValueError("dc_target must have the same number of elements as "
                             "ad_out.view(-1).")

    scale = jnp.asarray(coeff, jnp.float32) / jnp.float32(num)

    # Small-N fast path: typical DA batches are launch-overhead bound -> let XLA fuse it.
    if num <= small_n_threshold:
        xf = x.astype(jnp.float32)
        if dc_target is None:
            yf = (jnp.arange(num, dtype=jnp.int32) < batch_size).astype(jnp.float32)
        else:
            yf = y.astype(jnp.float32)
        return scale * jnp.sum(_bce_with_logits(xf, yf))

    tile_rows, rows_padded, num_chunks, steps = _plan(num, max_tile_rows)
    if rows_padded * _LANES > jnp.iinfo(jnp.int32).max:
        raise ValueError("in-kernel int32 global indexing would overflow for this size")

    x2d = _to_tiles(x, rows_padded)
    meta = jnp.array([num, batch_size], dtype=jnp.int32)

    def _tile_index(c, s):
        return (c * steps + s, 0)

    tile_spec_x = pl.BlockSpec((tile_rows, _LANES), _tile_index)
    smem_spec = pl.BlockSpec(memory_space=pltpu.SMEM)
    out_spec = pl.BlockSpec((8, _LANES), lambda c, s: (c, 0))
    out_shape = jax.ShapeDtypeStruct((num_chunks * 8, _LANES), jnp.float32)
    compiler_params = pltpu.CompilerParams(
        dimension_semantics=("parallel", "arbitrary"),
        vmem_limit_bytes=32 * 1024 * 1024)   # explicit sizing (v7x has 64 MiB physical)

    if dc_target is None:
        kernel = functools.partial(_daloss_default_kernel,
                                   tile_rows=tile_rows, steps_per_chunk=steps)
        partials = pl.pallas_call(
            kernel,
            out_shape=out_shape,
            grid=(num_chunks, steps),
            in_specs=[smem_spec, tile_spec_x],
            out_specs=out_spec,
            compiler_params=compiler_params,
        )(meta, x2d)
    else:
        y2d = _to_tiles(y, rows_padded)
        tile_spec_y = pl.BlockSpec((tile_rows, _LANES), _tile_index)
        kernel = functools.partial(_daloss_target_kernel,
                                   tile_rows=tile_rows, steps_per_chunk=steps)
        partials = pl.pallas_call(
            kernel,
            out_shape=out_shape,
            grid=(num_chunks, steps),
            in_specs=[smem_spec, tile_spec_x, tile_spec_y],
            out_specs=out_spec,
            compiler_params=compiler_params,
        )(meta, x2d, y2d)

    # Tiny XLA combine of the per-chunk (8,128) partials + fold in coeff / N.
    return scale * jnp.sum(partials)


def _reference(ad_out, coeff=1.0, dc_target=None):
    batch_size = ad_out.shape[0] // 2
    x = jnp.reshape(ad_out, (-1,)).astype(jnp.float32)
    if dc_target is None:
        dc_target = jnp.concatenate(
            [jnp.ones((batch_size,), jnp.float32),
             jnp.zeros((batch_size,), jnp.float32)], 0)
    y = jnp.reshape(dc_target, (-1,)).astype(jnp.float32)
    loss = jnp.maximum(x, 0.0) - x * y + jnp.log1p(jnp.exp(-jnp.abs(x)))
    return coeff * jnp.mean(loss)


if __name__ == "__main__":
    key = jax.random.PRNGKey(0)
    k0, k1, k2, k3 = jax.random.split(key, 4)

    # 1) Typical small DA batch: fast path (fused XLA), default dc_target.
    ad_out = jax.random.normal(k0, (8, 1), dtype=jnp.float32)
    got = da_loss(ad_out, coeff=0.7)
    jax.block_until_ready(got)
    want = _reference(ad_out, coeff=0.7)
    assert jnp.allclose(got, want, rtol=1e-5, atol=1e-6), (got, want)

    # 2) bf16 logits + explicit dc_target; force the Pallas path (tail masking).
    ad_out_bf16 = jax.random.normal(k1, (300, 1), dtype=jnp.bfloat16)
    dc_target = jnp.concatenate(
        [jnp.ones((150,), jnp.float32), jnp.zeros((150,), jnp.float32)], 0)
    got = da_loss(ad_out_bf16, coeff=1.3, dc_target=dc_target, small_n_threshold=0)
    jax.block_until_ready(got)
    want = _reference(ad_out_bf16, coeff=1.3, dc_target=dc_target)
    assert jnp.allclose(got, want, rtol=1e-4, atol=1e-5), (got, want)

    # 3) Default target with batch_size boundary + padded tail inside one tile.
    ad_out_odd = jax.random.normal(k2, (2000, 1), dtype=jnp.float32)
    got = da_loss(ad_out_odd, coeff=0.5, small_n_threshold=0)
    jax.block_until_ready(got)
    want = _reference(ad_out_odd, coeff=0.5)
    assert jnp.allclose(got, want, rtol=1e-5, atol=1e-6), (got, want)

    # 4) Multi-chunk ("parallel") x multi-step ("arbitrary") grid with small tiles.
    ad_out_big = jax.random.normal(k3, (16384, 1), dtype=jnp.float32)
    got = da_loss(ad_out_big, coeff=0.5, small_n_threshold=0, max_tile_rows=32)
    jax.block_until_ready(got)
    want = _reference(ad_out_big, coeff=0.5)
    assert jnp.allclose(got, want, rtol=2e-5, atol=1e-5), (got, want)

    print("KERNEL_OK")
</pallas_src>

<mosaic_0001>
module attributes {stable_mosaic.version = 11 : i64} {
  func.func @_daloss_target_kernel(%arg0: i32, %arg1: i32, %arg2: memref<2xi32, #tpu.memory_space<smem>>, %arg3: memref<16x128xbf16, #tpu.memory_space<vmem>>, %arg4: memref<16x128xbf16, #tpu.memory_space<vmem>>, %arg5: memref<8x128xf32, #tpu.memory_space<vmem>>) attributes {dimension_semantics = [#tpu.dimension_semantics<parallel>, #tpu.dimension_semantics<arbitrary>], iteration_bounds = array<i64: 1, 1>, scalar_prefetch = 0 : i64, scratch_operands = 0 : i64, tpu.core_type = #tpu.core_type<tc>, window_params = [{transform_indices = @transform_0, window_bounds = array<i64: 2>}, {transform_indices = @transform_1, window_bounds = array<i64: 16, 128>}, {transform_indices = @transform_2, window_bounds = array<i64: 16, 128>}, {transform_indices = @transform_3, window_bounds = array<i64: 8, 128>}]} {
    %c1_i32 = arith.constant 1 : i32
    %0 = arith.muli %arg0, %c1_i32 : i32
    %1 = arith.addi %0, %arg1 : i32
    %c2048_i32 = arith.constant 2048 : i32
    %2 = arith.muli %1, %c2048_i32 : i32
    %c0 = arith.constant 0 : index
    %3 = memref.load %arg2[%c0] : memref<2xi32, #tpu.memory_space<smem>>
    %c0_i32 = arith.constant 0 : i32
    %4 = arith.cmpi eq, %arg1, %c0_i32 : i32
    %5 = arith.extui %4 : i1 to i32
    %c0_i32_0 = arith.constant 0 : i32
    %6 = arith.cmpi ne, %5, %c0_i32_0 : i32
    scf.if %6 {
      %cst = arith.constant 0.000000e+00 : f32
      %18 = vector.broadcast %cst : f32 to vector<8x128xf32>
      %c0_8 = arith.constant 0 : index
      %c0_9 = arith.constant 0 : index
      %19 = vector.load %arg5[%c0_8, %c0_9] : memref<8x128xf32, #tpu.memory_space<vmem>>, vector<8x128xf32>
      tpu.vector_store %arg5[%c0_8, %c0_9], %18 {strides = array<i32>} : memref<8x128xf32, #tpu.memory_space<vmem>>, vector<8x128xf32>,
    } else {
    }
    %c0_1 = arith.constant 0 : index
    %c0_2 = arith.constant 0 : index
    %7 = vector.load %arg3[%c0_1, %c0_2] : memref<16x128xbf16, #tpu.memory_space<vmem>>, vector<16x128xbf16>
    %8 = arith.extf %7 : vector<16x128xbf16> to vector<16x128xf32>
    %c0_3 = arith.constant 0 : index
    %c0_4 = arith.constant 0 : index
    %9 = vector.load %arg4[%c0_3, %c0_4] : memref<16x128xbf16, #tpu.memory_space<vmem>>, vector<16x128xbf16>
    %10 = arith.extf %9 : vector<16x128xbf16> to vector<16x128xf32>
    %c2048_i32_5 = arith.constant 2048 : i32
    %11 = arith.addi %2, %c2048_i32_5 : i32
    %12 = arith.cmpi sle, %11, %3 : i32
    %13 = arith.extui %12 : i1 to i32
    %c0_i32_6 = arith.constant 0 : i32
    %14 = arith.cmpi ne, %13, %c0_i32_6 : i32
    scf.if %14 {
      %c0_8 = arith.constant 0 : index
      %c0_9 = arith.constant 0 : index
      %18 = vector.load %arg5[%c0_8, %c0_9] : memref<8x128xf32, #tpu.memory_space<vmem>>, vector<8x128xf32>
      %cst = arith.constant 0.000000e+00 : f32
      %19 = vector.broadcast %cst : f32 to vector<16x128xf32>
      %20 = arith.maximumf %8, %19 : vector<16x128xf32>
      %21 = arith.mulf %8, %10 : vector<16x128xf32>
      %22 = arith.subf %20, %21 : vector<16x128xf32>
      %23 = math.absf %8 : vector<16x128xf32>
      %cst_10 = arith.constant 0.000000e+00 : f32
      %24 = vector.broadcast %cst_10 : f32 to vector<16x128xf32>
      %25 = arith.subf %24, %23 : vector<16x128xf32>
      %26 = math.exp %25 : vector<16x128xf32>
      %27 = math.log1p %26 : vector<16x128xf32>
      %28 = arith.addf %22, %27 : vector<16x128xf32>
      %29 = vector.shape_cast %28 : vector<16x128xf32> to vector<2x8x128xf32>
      %cst_11 = arith.constant dense<0.000000e+00> : vector<8x128xf32>
      %30 = vector.multi_reduction <add>, %29, %cst_11 [0] : vector<2x8x128xf32> to vector<8x128xf32>
      %31 = arith.addf %18, %30 : vector<8x128xf32>
      %c0_12 = arith.constant 0 : index
      %c0_13 = arith.constant 0 : index
      %32 = vector.load %arg5[%c0_12, %c0_13] : memref<8x128xf32, #tpu.memory_space<vmem>>, vector<8x128xf32>
      tpu.vector_store %arg5[%c0_12, %c0_13], %31 {strides = array<i32>} : memref<8x128xf32, #tpu.memory_space<vmem>>, vector<8x128xf32>,
    } else {
    }
    %true = arith.constant true
    %15 = arith.xori %12, %true : i1
    %16 = arith.extui %15 : i1 to i32
    %c0_i32_7 = arith.constant 0 : i32
    %17 = arith.cmpi ne, %16, %c0_i32_7 : i32
    scf.if %17 {
      %18 = tpu.iota {dimensions = array<i32: 0>} : vector<16x128xi32>
      %19 = tpu.iota {dimensions = array<i32: 1>} : vector<16x128xi32>
      %c128_i32 = arith.constant 128 : i32
      %20 = vector.broadcast %c128_i32 : i32 to vector<16x128xi32>
      %21 = arith.muli %18, %20 : vector<16x128xi32>
      %22 = vector.broadcast %2 : i32 to vector<16x128xi32>
      %23 = arith.addi %22, %21 : vector<16x128xi32>
      %24 = arith.addi %23, %19 : vector<16x128xi32>
      %c0_8 = arith.constant 0 : index
      %c0_9 = arith.constant 0 : index
      %25 = vector.load %arg5[%c0_8, %c0_9] : memref<8x128xf32, #tpu.memory_space<vmem>>, vector<8x128xf32>
      %26 = vector.broadcast %3 : i32 to vector<16x128xi32>
      %27 = arith.cmpi slt, %24, %26 : vector<16x128xi32>
      %cst = arith.constant 0.000000e+00 : f32
      %28 = vector.broadcast %cst : f32 to vector<16x128xf32>
      %29 = arith.maximumf %8, %28 : vector<16x128xf32>
      %30 = arith.mulf %8, %10 : vector<16x128xf32>
      %31 = arith.subf %29, %30 : vector<16x128xf32>
      %32 = math.absf %8 : vector<16x128xf32>
      %cst_10 = arith.constant 0.000000e+00 : f32
      %33 = vector.broadcast %cst_10 : f32 to vector<16x128xf32>
      %34 = arith.subf %33, %32 : vector<16x128xf32>
      %35 = math.exp %34 : vector<16x128xf32>
      %36 = math.log1p %35 : vector<16x128xf32>
      %37 = arith.addf %31, %36 : vector<16x128xf32>
      %cst_11 = arith.constant 0.000000e+00 : f32
      %38 = vector.broadcast %cst_11 : f32 to vector<16x128xf32>
      %39 = arith.select %27, %37, %38 : vector<16x128xi1>, vector<16x128xf32>
      %40 = vector.shape_cast %39 : vector<16x128xf32> to vector<2x8x128xf32>
      %cst_12 = arith.constant dense<0.000000e+00> : vector<8x128xf32>
      %41 = vector.multi_reduction <add>, %40, %cst_12 [0] : vector<2x8x128xf32> to vector<8x128xf32>
      %42 = arith.addf %25, %41 : vector<8x128xf32>
      %c0_13 = arith.constant 0 : index
      %c0_14 = arith.constant 0 : index
      %43 = vector.load %arg5[%c0_13, %c0_14] : memref<8x128xf32, #tpu.memory_space<vmem>>, vector<8x128xf32>
      tpu.vector_store %arg5[%c0_13, %c0_14], %42 {strides = array<i32>} : memref<8x128xf32, #tpu.memory_space<vmem>>, vector<8x128xf32>,
    } else {
    }
    return
  }
  func.func @transform_0(%arg0: i32, %arg1: i32) -> i32 {
    %c0_i32 = arith.constant 0 : i32
    %c0_i32_0 = arith.constant 0 : i32
    return %c0_i32 : i32
  }
  func.func @transform_1(%arg0: i32, %arg1: i32) -> (i32, i32) {
    %c1_i32 = arith.constant 1 : i32
    %0 = arith.muli %arg0, %c1_i32 : i32
    %1 = arith.addi %0, %arg1 : i32
    %c0_i32 = arith.constant 0 : i32
    %c0_i32_0 = arith.constant 0 : i32
    return %1, %c0_i32 : i32, i32
  }
  func.func @transform_2(%arg0: i32, %arg1: i32) -> (i32, i32) {
    %c1_i32 = arith.constant 1 : i32
    %0 = arith.muli %arg0, %c1_i32 : i32
    %1 = arith.addi %0, %arg1 : i32
    %c0_i32 = arith.constant 0 : i32
    %c0_i32_0 = arith.constant 0 : i32
    return %1, %c0_i32 : i32, i32
  }
  func.func @transform_3(%arg0: i32, %arg1: i32) -> (i32, i32) {
    %c0_i32 = arith.constant 0 : i32
    %c0_i32_0 = arith.constant 0 : i32
    return %arg0, %c0_i32 : i32, i32
  }
}

</mosaic_0001>

<llo_original>
// kernel: tpu_custom_call.1
$region0: #{tpu_custom_call.1}
  #allocation0 [shape = 'u32[]', space=smem, size = 0x4, offset = 0x4, fixed_abs, tag = 'smem constant byte address 0x4 - core index']
  #allocation1 [shape = 'u32[144,128]{1,0:T(1,128)}', space=vmem, size = 0x12000, scoped, tag = 'internal scratch']
  %s0 = inlined_call_operand.hbm [shape: s32[2], index: 0, kind: input, shape index: {}]
  %s1 = inlined_call_operand.hbm [shape: bf16[16,128], index: 1, kind: input, shape index: {}]
  %s2 = inlined_call_operand.hbm [shape: bf16[16,128], index: 2, kind: input, shape index: {}]
  %s3 = inlined_call_operand.hbm [shape: f32[8,128], index: 3, kind: output, shape index: {}]
  %s4 = sld [smem:[#allocation0]]
  $region46: #{tpu_custom_call.1} parent=0
    _
  %s6 = ssub.s32 1, %s4
  %s7 = scalar_select 0, %s6, %s4
  $region1: #{tpu_custom_call.1} parent=0
    #allocation2 [shape = 'u8[512]{0}', space=smem, size = 0x200, scoped, tag = 'input window, operand 0, single buffered']
    #allocation3 [shape = 's32[1]{0}', space=sflag, size = 0x4, scoped, tag = 'scoped memory for tpu_custom_call.1']
    #allocation4 [shape = 's32[1]{0}', space=sflag, size = 0x4, scoped, tag = 'scoped memory for tpu_custom_call.1']
    #allocation5 [shape = 's32[1]{0}', space=sflag, size = 0x4, scoped, tag = 'scoped memory for tpu_custom_call.1']
    #allocation6 [shape = 'u8[4096]{0}', space=vmem, size = 0x1000, scoped, tag = 'input window, operand 1, single buffered']
    #allocation7 [shape = 'u8[4096]{0}', space=vmem, size = 0x1000, scoped, tag = 'input window, operand 2, single buffered']
    #allocation8 [shape = 's32[1]{0}', space=sflag, size = 0x4, scoped, tag = 'scoped memory for tpu_custom_call.1']
    #allocation9 [shape = 'u8[4096]{0}', space=vmem, size = 0x1000, scoped, tag = 'output window, operand 0, single buffered']
    %8 = vsyncpa [#allocation5], 0
    %9 = vsyncpa [#allocation3], 0
    %10 = vsyncpa [#allocation8], 0
    %11 = vsyncpa [#allocation4], 0
    // Predicated region
    $region2: #{tpu_custom_call.1} parent=1 // pred_check
      _
    $region3: #{tpu_custom_call.1} parent=1 // pred_check_branch
      %13 = sbr.rel (0) target = $region5
    $region4: #{tpu_custom_call.1} parent=1 // pred_region
      %s15 = ssub.s32 16, 16
      %16 = vsyncadd [#allocation5], %s15
      %19 = dma.hbm_to_smem %s0, 16, [#allocation2], [#allocation5]
    $region5: #{tpu_custom_call.1} parent=1 // pred_fallthru
      _
    // Predicated region
    $region6: #{tpu_custom_call.1} parent=1 // pred_check
      _
    $region7: #{tpu_custom_call.1} parent=1 // pred_check_branch
      %21 = sbr.rel (0) target = $region9
    $region8: #{tpu_custom_call.1} parent=1 // pred_region
      %s22 = sadd.s32 0, 0
      %s23 = smul.u32 2, %s22
      %s25 = ssub.s32 128, 128
      %26 = vsyncadd [#allocation3], %s25
      %s27 = smul.addr %s23, 64
      %s28 = scalar_lea.hbm %s1, %s27
      %s29 = sshll.u32 [#allocation6], 4
      %s30 = int_to_ptr.vmem [resolvable:$true] %s29
      %35 = dma.hbm_to_vmem [thread:$0]  %s28, 128, %s30, [#allocation3], 64, 64, 4
    $region9: #{tpu_custom_call.1} parent=1 // pred_fallthru
      _
    // Predicated region
    $region10: #{tpu_custom_call.1} parent=1 // pred_check
      _
    $region11: #{tpu_custom_call.1} parent=1 // pred_check_branch
      %37 = sbr.rel (0) target = $region13
    $region12: #{tpu_custom_call.1} parent=1 // pred_region
      %s38 = sadd.s32 0, 0
      %s39 = smul.u32 2, %s38
      %s41 = ssub.s32 128, 128
      %42 = vsyncadd [#allocation8], %s41
      %s43 = smul.addr %s39, 64
      %s44 = scalar_lea.hbm %s2, %s43
      %s45 = sshll.u32 [#allocation7], 4
      %s46 = int_to_ptr.vmem [resolvable:$true] %s45
      %51 = dma.hbm_to_vmem [thread:$0]  %s44, 128, %s46, [#allocation8], 64, 64, 4
    $region13: #{tpu_custom_call.1} parent=1 // pred_fallthru
      _
    // Predicated region
    $region14: #{tpu_custom_call.1} parent=1 // pred_check
      _
    $region15: #{tpu_custom_call.1} parent=1 // pred_check_branch
      %53 = sbr.rel (0) target = $region17
    $region16: #{tpu_custom_call.1} parent=1 // pred_region
      %54 = dma.done [#allocation5], 16
    $region17: #{tpu_custom_call.1} parent=1 // pred_fallthru
      _
    // Predicated region
    $region18: #{tpu_custom_call.1} parent=1 // pred_check
      _
    $region19: #{tpu_custom_call.1} parent=1 // pred_check_branch
      %56 = sbr.rel (0) target = $region21
    $region20: #{tpu_custom_call.1} parent=1 // pred_region
      %57 = dma.done [#allocation3], 128
    $region21: #{tpu_custom_call.1} parent=1 // pred_fallthru
      _
    // Predicated region
    $region22: #{tpu_custom_call.1} parent=1 // pred_check
      _
    $region23: #{tpu_custom_call.1} parent=1 // pred_check_branch
      %59 = sbr.rel (0) target = $region25
    $region24: #{tpu_custom_call.1} parent=1 // pred_region
      %60 = dma.done [#allocation8], 128
    $region25: #{tpu_custom_call.1} parent=1 // pred_fallthru
      _
    %61 = sfence
    %s62 = sadd.s32 0, 0
    %s63 = smul.u32 2, %s62
    %s64 = sadd.s32 0, 0
    %s65 = smul.u32 2, %s64
    %s66 = sadd.s32 0, 0
    %s67 = smul.u32 %s66, 2048
    %s68 = sld [smem:[#allocation2]]
    %p69 = scmp.eq.s32.totalorder 0, 0
    // Predicated region
    $region26: #{tpu_custom_call.1} parent=1 // pred_check
      %p70 = pneg %p69
    $region27: #{tpu_custom_call.1} parent=1 // pred_check_branch
      %72 = sbr.rel (%p70) target = $region29
    $region28: #{tpu_custom_call.1} parent=1 // pred_region
      %73 = vst [vmem:[#allocation9] sm:$0xff] 0.0
    $region29: #{tpu_custom_call.1} parent=1 // pred_fallthru
      _
    %v74 = vld [vmem:[#allocation6] sm:$0xf]
    %v75 = vld [vmem:[#allocation6 + $0x4] sm:$0xf]
    %v76 = vunpack.c.l.bf16 %v74
    %v77 = vunpack.c.l.bf16 %v75
    %v78 = vld [vmem:[#allocation7] sm:$0xf]
    %v79 = vld [vmem:[#allocation7 + $0x4] sm:$0xf]
    %v80 = vunpack.c.l.bf16 %v78
    %v81 = vunpack.c.l.bf16 %v79
    %s82 = sadd.s32 %s67, 2048
    %p83 = scmp.le.s32.totalorder %s82, %s68
    // Predicated region
    $region30: #{tpu_custom_call.1} parent=1 // pred_check
      %p84 = pneg %p83
    $region31: #{tpu_custom_call.1} parent=1 // pred_check_branch
      %86 = sbr.rel (%p84) target = $region33
    $region32: #{tpu_custom_call.1} parent=1 // pred_region
      %v87 = vld [vmem:[#allocation9] sm:$0xff]
      %v88 = vmax.f32 %v76, 0.0
      %v89 = vmax.f32 %v77, 0.0
      %v90 = vmul.f32 %v76, %v80
      %v91 = vmul.f32 %v77, %v81
      %v92 = vsub.f32 %v88, %v90
      %v93 = vsub.f32 %v89, %v91
      %v94 = vand.u32 2147483647, %v76
      %v95 = vand.u32 2147483647, %v77
      %v96 = vsub.f32 0.0, %v94
      %v97 = vsub.f32 0.0, %v95
      %v98 = vmul.f32 %v96, 1.442695
      %v99 = vpow.pop %v98
      %v100 = vmul.f32 %v97, 1.442695
      %v101 = vpow.pop %v100
      %v102 = vadd.f32 %v99, 1.0
      %v103 = vlog2.pop %v102
      %v104 = vmul.f32 %v103, 0.6931472
      %v105 = vmul.f32 -0.5, %v99
      %v106 = vadd.f32 %v105, 1.0
      %v107 = vmul.f32 %v106, %v99
      %v108 = vand.u32 2147483647, %v99
      %vm109 = vcmp.lt.f32.partialorder %v108, 0.0004427343
      %v110 = vsel %vm109, %v107, %v104
      %v111 = vadd.f32 %v101, 1.0
      %v112 = vlog2.pop %v111
      %v113 = vmul.f32 %v112, 0.6931472
      %v114 = vmul.f32 -0.5, %v101
      %v115 = vadd.f32 %v114, 1.0
      %v116 = vmul.f32 %v115, %v101
      %v117 = vand.u32 2147483647, %v101
      %vm118 = vcmp.lt.f32.partialorder %v117, 0.0004427343
      %v119 = vsel %vm118, %v116, %v113
      %v120 = vadd.f32 %v92, %v110
      %v121 = vadd.f32 %v93, %v119
      %v122 = vadd.f32 %v120, %v121
      %v123 = vadd.f32 %v87, %v122
      %124 = vst [vmem:[#allocation9] sm:$0xff] %v123
    $region33: #{tpu_custom_call.1} parent=1 // pred_fallthru
      _
    %p125 = scmp.gt.s32.totalorder %s82, %s68
    // Predicated region
    $region34: #{tpu_custom_call.1} parent=1 // pred_check
      %p126 = pneg %p125
    $region35: #{tpu_custom_call.1} parent=1 // pred_check_branch
      %128 = sbr.rel (%p126) target = $region37
    $region36: #{tpu_custom_call.1} parent=1 // pred_region
      %v129 = vlaneseq
      %v130 = vshrl.u32 %v129, 7
      %v131 = vadd.s32 %v130, 8
      %v132 = vlaneseq
      %v133 = vand.u32 %v132, 127
      %v134 = vmul.u32 %v130, 128
      %v135 = vmul.u32 %v131, 128
      %v136 = vstv %s67
      %v137 = vadd.s32 %v136, %v134
      %v138 = vadd.s32 %v136, %v135
      %v139 = vadd.s32 %v137, %v133
      %v140 = vadd.s32 %v138, %v133
      %v141 = vld [vmem:[#allocation9] sm:$0xff]
      %v142 = vstv %s68
      %vm143 = vcmp.lt.s32.totalorder %v139, %v142
      %vm144 = vcmp.lt.s32.totalorder %v140, %v142
      %v145 = vmax.f32 %v76, 0.0
      %v146 = vmax.f32 %v77, 0.0
      %v147 = vmul.f32 %v76, %v80
      %v148 = vmul.f32 %v77, %v81
      %v149 = vsub.f32 %v145, %v147
      %v150 = vsub.f32 %v146, %v148
      %v151 = vand.u32 2147483647, %v76
      %v152 = vand.u32 2147483647, %v77
      %v153 = vsub.f32 0.0, %v151
      %v154 = vsub.f32 0.0, %v152
      %v155 = vmul.f32 %v153, 1.442695
      %v156 = vpow.pop %v155
      %v157 = vmul.f32 %v154, 1.442695
      %v158 = vpow.pop %v157
      %v159 = vadd.f32 %v156, 1.0
      %v160 = vlog2.pop %v159
      %v161 = vmul.f32 %v160, 0.6931472
      %v162 = vmul.f32 -0.5, %v156
      %v163 = vadd.f32 %v162, 1.0
      %v164 = vmul.f32 %v163, %v156
      %v165 = vand.u32 2147483647, %v156
      %vm166 = vcmp.lt.f32.partialorder %v165, 0.0004427343
      %v167 = vsel %vm166, %v164, %v161
      %v168 = vadd.f32 %v158, 1.0
      %v169 = vlog2.pop %v168
      %v170 = vmul.f32 %v169, 0.6931472
      %v171 = vmul.f32 -0.5, %v158
      %v172 = vadd.f32 %v171, 1.0
      %v173 = vmul.f32 %v172, %v158
      %v174 = vand.u32 2147483647, %v158
      %vm175 = vcmp.lt.f32.partialorder %v174, 0.0004427343
      %v176 = vsel %vm175, %v173, %v170
      %v177 = vadd.f32 %v149, %v167
      %v178 = vadd.f32 %v150, %v176
      %v179 = vsel %vm143, %v177, 0.0
      %v180 = vsel %vm144, %v178, 0.0
      %v181 = vadd.f32 %v179, %v180
      %v182 = vadd.f32 %v141, %v181
      %183 = vst [vmem:[#allocation9] sm:$0xff] %v182
    $region37: #{tpu_custom_call.1} parent=1 // pred_fallthru
      _
    // Predicated region
    $region38: #{tpu_custom_call.1} parent=1 // pred_check
      _
    $region39: #{tpu_custom_call.1} parent=1 // pred_check_branch
      %185 = sbr.rel (0) target = $region41
    $region40: #{tpu_custom_call.1} parent=1 // pred_region
      %s187 = ssub.s32 128, 128
      %188 = vsyncadd [#allocation4], %s187
      %s190 = sshll.u32 [#allocation9], 4
      %s191 = int_to_ptr.vmem [resolvable:$true] %s190
      %193 = dma.vmem_to_hbm [thread:$0]  %s191, 128, %s3, [#allocation4]
    $region41: #{tpu_custom_call.1} parent=1 // pred_fallthru
      _
    // Predicated region
    $region42: #{tpu_custom_call.1} parent=1 // pred_check
      _
    $region43: #{tpu_custom_call.1} parent=1 // pred_check_branch
      %195 = sbr.rel (0) target = $region45
    $region44: #{tpu_custom_call.1} parent=1 // pred_region
      %196 = dma.done [#allocation4], 128
    $region45: #{tpu_custom_call.1} parent=1 // pred_fallthru
      _
    %197 = vsyncpa [#allocation3], 1
    %198 = vsyncpa [#allocation8], 1
    %199 = vsyncpa [#allocation4], 1
    %200 = vsyncpa [#allocation5], 1

</llo_original>
